<compile_context>
chip_gen: v6e
topology: v6e:2x2x1
jax: 0.10.0
libtpu: 0.0.40
codegen_flags: <defaults>
</compile_context>

<pallas_src>
import jax
import jax.numpy as jnp
from jax.experimental import pallas as pl
from jax.experimental.pallas import tpu as pltpu

_LANE = 128


def _linear_block_kernel(x_ref, w_ref, shift_ref, o_ref):
    # x_ref:     (1, Cin, TS)  f32    -- NCHW slab, spatial on the lane axis
    # w_ref:     (Cout, Cin)   bf16   -- 1x1 conv weight with BN scale folded in
    # shift_ref: (Cout, 1)     f32    -- beta - mean * gamma / sqrt(var + eps)
    # o_ref:     (1, Cout, TS) f32
    x = x_ref[0].astype(jnp.bfloat16)                     # cast under DMA (VPU)
    y = jnp.dot(w_ref[...], x, preferred_element_type=jnp.float32)
    o_ref[0] = (y + shift_ref[...]).astype(o_ref.dtype)


def linear_block(x_nchw, conv_weight, gamma, beta, running_mean, running_var,
                 eps=1e-5):
    """Conv2d(in_c, out_c, kernel=(1,1), stride=(1,1), padding=(0,0),
    groups=1, bias=False) followed by BatchNorm2d(out_c) (eval mode).

    x_nchw:      (N, Cin, H, W)  float32
    conv_weight: (Cout, Cin, 1, 1)
    gamma/beta/running_mean/running_var: (Cout,)
    returns      (N, Cout, H, W) float32
    """
    N, Cin, H, W = x_nchw.shape
    Cout = conv_weight.shape[0]
    S = H * W

    # Fold BatchNorm (eval mode) into the weight + a per-channel shift (f32).
    scale = gamma / jnp.sqrt(running_var + eps)                  # (Cout,)
    shift = (beta - running_mean * scale).reshape(Cout, 1)       # (Cout, 1)
    w = (conv_weight.reshape(Cout, Cin) * scale[:, None]).astype(jnp.bfloat16)

    # ---- Generation-aware VMEM budgeting ---------------------------------
    try:
        vmem_cap = int(pltpu.get_tpu_info().vmem_capacity_bytes)
    except Exception:
        vmem_cap = 64 * 1024 * 1024          # v7x worst case (per TensorCore)

    # Double-buffered weight + shift footprint (constant index maps still get
    # their own VMEM buffers).
    fixed = 2 * (Cout * Cin * 2 + Cout * 4)
    # Budget for the double-buffered spatial tiles (leave headroom for the
    # compiler's own scratch / semaphores / spills).
    tile_budget = max(2 * 1024 * 1024, int(vmem_cap * 0.35) - fixed)
    bytes_per_col = Cin * 4 + Cout * 4       # f32 in-column + f32 out-column
    ts_cap = tile_budget // (2 * bytes_per_col) // _LANE * _LANE
    assert ts_cap >= _LANE or S < _LANE, (
        "Cin/Cout too large for a single-K spatial tile in VMEM; "
        "TODO(synk): add a K-reduction grid axis.")

    # Spatial (lane) tile: as large as the budget allows (long contiguous DMA
    # bursts), capped at 32768 lanes, never larger than the spatial extent.
    if S < _LANE:
        TS = S                                # full-dim block (valid layout)
    else:
        TS = max(_LANE, min(ts_cap, 32768, (S // _LANE) * _LANE))
    grid_s = pl.cdiv(S, TS)                   # partial edge block is masked
    grid = (N, grid_s)

    vmem_need = fixed + 2 * bytes_per_col * TS + (4 << 20)   # + compiler slack
    vmem_limit = int(min(max(vmem_need, 32 << 20), int(0.9 * vmem_cap)))

    # View as (N, Cin, S); no padding, no dtype pass over HBM.
    x3 = x_nchw.reshape(N, Cin, S)

    cost = pl.CostEstimate(
        flops=2 * N * grid_s * TS * Cin * Cout,
        transcendentals=0,
        bytes_accessed=(N * Cin * S * 4          # f32 activations in
                        + Cout * Cin * 2         # bf16 folded weights
                        + Cout * 4               # shift
                        + N * Cout * S * 4),     # f32 out
    )

    out3 = pl.pallas_call(
        _linear_block_kernel,
        out_shape=jax.ShapeDtypeStruct((N, Cout, S), jnp.float32),
        grid=grid,
        in_specs=[
            pl.BlockSpec((1, Cin, TS), lambda n, s: (n, 0, s)),
            pl.BlockSpec((Cout, Cin), lambda n, s: (0, 0)),
            pl.BlockSpec((Cout, 1), lambda n, s: (0, 0)),
        ],
        out_specs=pl.BlockSpec((1, Cout, TS), lambda n, s: (n, 0, s)),
        compiler_params=pltpu.CompilerParams(
            dimension_semantics=("parallel", "parallel"),
            vmem_limit_bytes=vmem_limit),
        cost_estimate=cost,
    )(x3, w, shift)

    return out3.reshape(N, Cout, H, W)


def _reference_f32(x_nchw, conv_weight, gamma, beta, running_mean, running_var,
                   eps=1e-5):
    """Pure-JAX f32 reference (lax conv + eval-mode BN)."""
    y = jax.lax.conv_general_dilated(
        x_nchw, conv_weight, window_strides=(1, 1), padding="VALID",
        dimension_numbers=("NCHW", "OIHW", "NCHW"),
        precision=jax.lax.Precision.HIGHEST)
    scale = gamma / jnp.sqrt(running_var + eps)
    shift = beta - running_mean * scale
    return y * scale[None, :, None, None] + shift[None, :, None, None]


if __name__ == "__main__":
    # batch=2, in_c=4, out_c=8, spatial=16x16 (consistent with the module).
    N, Cin, Cout, H, W = 2, 4, 8, 16, 16
    S = H * W
    eps = 1e-5

    key = jax.random.PRNGKey(0)
    kx, kw, kg, kb, km, kv = jax.random.split(key, 6)

    x = jax.random.normal(kx, (N, Cin, H, W), dtype=jnp.float32)
    conv_weight = jax.random.normal(kw, (Cout, Cin, 1, 1), dtype=jnp.float32) * 0.1
    gamma = jax.random.normal(kg, (Cout,), dtype=jnp.float32) * 0.1 + 1.0
    beta = jax.random.normal(kb, (Cout,), dtype=jnp.float32) * 0.1
    running_mean = jax.random.normal(km, (Cout,), dtype=jnp.float32) * 0.1
    running_var = jax.random.uniform(kv, (Cout,), dtype=jnp.float32,
                                     minval=0.5, maxval=1.5)

    out = linear_block(x, conv_weight, gamma, beta, running_mean, running_var,
                       eps=eps)
    out = jax.block_until_ready(out)
    assert out.shape == (N, Cout, H, W)

    # Tight check: emulate the kernel numerics (BN scale folded into W, then
    # W and x rounded to bf16, f32 accumulate, + shift).
    scale = gamma / jnp.sqrt(running_var + eps)
    shift = beta - running_mean * scale
    w_q = (conv_weight.reshape(Cout, Cin) * scale[:, None]
           ).astype(jnp.bfloat16).astype(jnp.float32)
    x_q = x.reshape(N, Cin, S).astype(jnp.bfloat16).astype(jnp.float32)
    ref_q = (jnp.einsum("oi,nis->nos", w_q, x_q,
                        precision=jax.lax.Precision.HIGHEST)
             + shift[None, :, None]).reshape(N, Cout, H, W)

    # Loose check against the full-f32 reference (bf16 MXU inputs).
    ref_f32 = _reference_f32(x, conv_weight, gamma, beta, running_mean,
                             running_var, eps=eps)

    assert jnp.allclose(out, ref_q, atol=2e-3, rtol=2e-3), \
        float(jnp.max(jnp.abs(out - ref_q)))
    assert jnp.allclose(out, ref_f32, atol=5e-2, rtol=5e-2), \
        float(jnp.max(jnp.abs(out - ref_f32)))

    print("KERNEL_OK")
</pallas_src>

<mosaic_0001>
module attributes {stable_mosaic.version = 11 : i64} {
  func.func @_linear_block_kernel(%arg0: i32, %arg1: i32, %arg2: memref<1x4x256xf32, #tpu.memory_space<vmem>>, %arg3: memref<8x4xbf16, #tpu.memory_space<vmem>>, %arg4: memref<8x1xf32, #tpu.memory_space<vmem>>, %arg5: memref<1x8x256xf32, #tpu.memory_space<vmem>>) attributes {dimension_semantics = [#tpu.dimension_semantics<parallel>, #tpu.dimension_semantics<parallel>], iteration_bounds = array<i64: 2, 1>, scalar_prefetch = 0 : i64, scratch_operands = 0 : i64, tpu.core_type = #tpu.core_type<tc>, window_params = [{transform_indices = @transform_0, window_bounds = array<i64: 1, 4, 256>}, {pipeline_mode = #tpu.pipeline_mode<synchronous>, transform_indices = @transform_1, window_bounds = array<i64: 8, 4>}, {pipeline_mode = #tpu.pipeline_mode<synchronous>, transform_indices = @transform_2, window_bounds = array<i64: 8, 1>}, {transform_indices = @transform_3, window_bounds = array<i64: 1, 8, 256>}]} {
    %c0 = arith.constant 0 : index
    %c0_0 = arith.constant 0 : index
    %c0_1 = arith.constant 0 : index
    %0 = vector.load %arg2[%c0, %c0_0, %c0_1] : memref<1x4x256xf32, #tpu.memory_space<vmem>>, vector<1x4x256xf32>
    %1 = vector.shape_cast %0 : vector<1x4x256xf32> to vector<4x256xf32>
    %2 = arith.truncf %1 : vector<4x256xf32> to vector<4x256xbf16>
    %c0_2 = arith.constant 0 : index
    %c0_3 = arith.constant 0 : index
    %3 = vector.load %arg3[%c0_2, %c0_3] : memref<8x4xbf16, #tpu.memory_space<vmem>>, vector<8x4xbf16>
    %cst = arith.constant dense<0.000000e+00> : vector<8x256xf32>
    %4 = tpu.matmul %3, %2, %cst {dimension_numbers = #tpu.dot_dimension_numbers<[1], [0], [0], [1], [0, 0, 1, 1], [], []>} : vector<8x4xbf16>, vector<4x256xbf16>, vector<8x256xf32> -> vector<8x256xf32>
    %c0_4 = arith.constant 0 : index
    %c0_5 = arith.constant 0 : index
    %5 = vector.load %arg4[%c0_4, %c0_5] : memref<8x1xf32, #tpu.memory_space<vmem>>, vector<8x1xf32>
    %6 = vector.broadcast %5 : vector<8x1xf32> to vector<8x256xf32>
    %7 = arith.addf %4, %6 : vector<8x256xf32>
    %c0_6 = arith.constant 0 : index
    %c0_7 = arith.constant 0 : index
    %c0_8 = arith.constant 0 : index
    %8 = vector.load %arg5[%c0_6, %c0_7, %c0_8] : memref<1x8x256xf32, #tpu.memory_space<vmem>>, vector<1x8x256xf32>
    %9 = vector.shape_cast %8 : vector<1x8x256xf32> to vector<8x256xf32>
    %10 = vector.shape_cast %7 : vector<8x256xf32> to vector<1x8x256xf32>
    tpu.vector_store %arg5[%c0_6, %c0_7, %c0_8], %10 {strides = array<i32>} : memref<1x8x256xf32, #tpu.memory_space<vmem>>, vector<1x8x256xf32>,
    return
  }
  func.func @transform_0(%arg0: i32, %arg1: i32) -> (i32, i32, i32) {
    %c0_i32 = arith.constant 0 : i32
    %c0_i32_0 = arith.constant 0 : i32
    return %arg0, %c0_i32, %arg1 : i32, i32, i32
  }
  func.func @transform_1(%arg0: i32, %arg1: i32) -> (i32, i32) {
    %c0_i32 = arith.constant 0 : i32
    %c0_i32_0 = arith.constant 0 : i32
    %c0_i32_1 = arith.constant 0 : i32
    return %c0_i32, %c0_i32_0 : i32, i32
  }
  func.func @transform_2(%arg0: i32, %arg1: i32) -> (i32, i32) {
    %c0_i32 = arith.constant 0 : i32
    %c0_i32_0 = arith.constant 0 : i32
    %c0_i32_1 = arith.constant 0 : i32
    return %c0_i32, %c0_i32_0 : i32, i32
  }
  func.func @transform_3(%arg0: i32, %arg1: i32) -> (i32, i32, i32) {
    %c0_i32 = arith.constant 0 : i32
    %c0_i32_0 = arith.constant 0 : i32
    return %arg0, %c0_i32, %arg1 : i32, i32, i32
  }
}

</mosaic_0001>

<llo_original>
// kernel: tpu_custom_call.1
$region0: #{tpu_custom_call.1}
  #allocation0 [shape = 'u32[]', space=smem, size = 0x4, offset = 0x4, fixed_abs, tag = 'smem constant byte address 0x4 - core index']
  #allocation1 [shape = 'u32[144,128]{1,0:T(1,128)}', space=vmem, size = 0x12000, scoped, tag = 'internal scratch']
  %s0 = inlined_call_operand.hbm [shape: f32[2,4,256], index: 0, kind: input, shape index: {}]
  %s1 = inlined_call_operand.vmem [shape: bf16[8,4], index: 1, kind: input, shape index: {}]
  %s2 = inlined_call_operand.vmem [shape: f32[8,1], index: 2, kind: input, shape index: {}]
  %s3 = inlined_call_operand.hbm [shape: f32[2,8,256], index: 3, kind: output, shape index: {}]
  %s4 = sld [smem:[#allocation0]]
  $region49: #{tpu_custom_call.1} parent=0
    _
  %s6 = ssub.s32 1, %s4
  %s7 = scalar_select 0, %s6, %s4
  $region1: #{tpu_custom_call.1} parent=0
    #allocation2 [shape = 'u8[8192]{0}', space=vmem, size = 0x2000, scoped, tag = 'input window, operand 0']
    #allocation3 [shape = 's32[2]{0}', space=sflag, size = 0x8, scoped, tag = 'scoped memory for tpu_custom_call.1']
    #allocation4 [shape = 's32[2]{0}', space=sflag, size = 0x8, scoped, tag = 'scoped memory for tpu_custom_call.1']
    #allocation5 [shape = 'u8[16384]{0}', space=vmem, size = 0x4000, scoped, tag = 'output window, operand 0']
    %8 = vsyncpa [#allocation3], 0
    %s9 = scalar_lea.sflag [#allocation3], 1
    %10 = vsyncpa %s9, 0
    %11 = vsyncpa [#allocation4], 0
    %s12 = scalar_lea.sflag [#allocation4], 1
    %13 = vsyncpa %s12, 0
    loop: start=0, step=1, limit=4
    $region2: #{tpu_custom_call.1} parent=1 // loop_pre_header
      _
    $region3: #{tpu_custom_call.1} parent=1 // loop_header
      %s15 = sphi 0, %s19
      %p16 = scmp.ge.s32.totalorder %s15, 4
      %s22 = sphi 0, %s34
      %s23 = sphi 0, %s30
      %s24 = sphi 0, %s22
      %s25 = sphi 0, %s23
      %s26 = sphi 0, %s24
      %s27 = sphi 0, %s25
      %s39 = sphi 0, %s41
      %s42 = sphi 0, %s39
      %s43 = sphi 0, %s42
      %s59 = sphi 0, %s43
      %s63 = sphi 0, %s63
      %s65 = sphi 0, %s63
      %s66 = sphi 0, %s65
      %s80 = sphi 0, %s66
      %s84 = sphi 0, %s84
      %s86 = sphi 0, %s84
      %s87 = sphi 0, %s86
      %s101 = sphi 0, %s87
      %s109 = sphi 0, %s111
      %s112 = sphi 0, %s109
      %s113 = sphi 0, %s112
      %s129 = sphi 0, %s113
    $region4: #{tpu_custom_call.1} parent=1 // loop_header_branch
      %18 = sbr.rel (%p16) target = $region8
    $region5: #{tpu_custom_call.1} parent=1 // loop_body
      %s20 = ssub.s32 %s15, 1
      %s21 = ssub.s32 %s15, 2
      %s28 = sadd.s32 1, %s23
      %p29 = scmp.ge.s32.totalorder %s28, 1
      %s30 = scalar_select %p29, 0, %s28
      %s31 = sadd.s32 1, %s22
      %s32 = scalar_select %p29, %s31, %s22
      %p33 = scmp.ge.s32.totalorder %s32, 2
      %s34 = scalar_select %p33, 0, %s32
      %s35 = ssub.s32 %s22, %s34
      %s36 = ssub.s32 %s23, %s30
      %s37 = sor.u32 %s35, %s36
      %p38 = scmp.eq.s32.totalorder %s37, 0
      %s40 = sadd.s32 %s39, 1
      %s41 = scalar_select %p38, %s39, %s40
      %p44 = pneg %p38
      %p45 = scmp.eq.s32.totalorder %s15, 1
      %p46 = por %p44, %p45
      %p47 = scmp.ne.s32.totalorder %s39, %s42
      %p48 = scmp.eq.s32.totalorder %s15, 0
      %p49 = por %p47, %p48
      %p50 = scmp.ne.s32.totalorder %s39, %s42
      %p51 = scmp.eq.s32.totalorder %s20, 1
      %p52 = por %p50, %p51
      %p53 = scmp.ne.s32.totalorder %s42, %s43
      %p54 = scmp.eq.s32.totalorder %s20, 0
      %p55 = por %p53, %p54
      %p56 = scmp.ne.s32.totalorder %s42, %s43
      %p57 = scmp.eq.s32.totalorder %s21, 1
      %p58 = por %p56, %p57
      %p60 = scmp.ne.s32.totalorder %s43, %s59
      %p61 = scmp.eq.s32.totalorder %s21, 0
      %p62 = por %p60, %p61
      %s64 = sadd.s32 %s63, 1
      %p67 = scmp.eq.s32.totalorder %s15, 1
      %p68 = scmp.ne.s32.totalorder %s63, %s65
      %p69 = scmp.eq.s32.totalorder %s15, 0
      %p70 = por %p68, %p69
      %p71 = scmp.ne.s32.totalorder %s63, %s65
      %p72 = scmp.eq.s32.totalorder %s20, 1
      %p73 = por %p71, %p72
      %p74 = scmp.ne.s32.totalorder %s65, %s66
      %p75 = scmp.eq.s32.totalorder %s20, 0
      %p76 = por %p74, %p75
      %p77 = scmp.ne.s32.totalorder %s65, %s66
      %p78 = scmp.eq.s32.totalorder %s21, 1
      %p79 = por %p77, %p78
      %p81 = scmp.ne.s32.totalorder %s66, %s80
      %p82 = scmp.eq.s32.totalorder %s21, 0
      %p83 = por %p81, %p82
      %s85 = sadd.s32 %s84, 1
      %p88 = scmp.eq.s32.totalorder %s15, 1
      %p89 = scmp.ne.s32.totalorder %s84, %s86
      %p90 = scmp.eq.s32.totalorder %s15, 0
      %p91 = por %p89, %p90
      %p92 = scmp.ne.s32.totalorder %s84, %s86
      %p93 = scmp.eq.s32.totalorder %s20, 1
      %p94 = por %p92, %p93
      %p95 = scmp.ne.s32.totalorder %s86, %s87
      %p96 = scmp.eq.s32.totalorder %s20, 0
      %p97 = por %p95, %p96
      %p98 = scmp.ne.s32.totalorder %s86, %s87
      %p99 = scmp.eq.s32.totalorder %s21, 1
      %p100 = por %p98, %p99
      %p102 = scmp.ne.s32.totalorder %s87, %s101
      %p103 = scmp.eq.s32.totalorder %s21, 0
      %p104 = por %p102, %p103
      %s105 = ssub.s32 %s22, %s34
      %s106 = ssub.s32 %s23, %s30
      %s107 = sor.u32 %s105, %s106
      %p108 = scmp.eq.s32.totalorder %s107, 0
      %s110 = sadd.s32 %s109, 1
      %s111 = scalar_select %p108, %s109, %s110
      %p114 = pneg %p108
      %p115 = scmp.eq.s32.totalorder %s15, 1
      %p116 = por %p114, %p115
      %p117 = scmp.ne.s32.totalorder %s109, %s112
      %p118 = scmp.eq.s32.totalorder %s15, 0
      %p119 = por %p117, %p118
      %p120 = scmp.ne.s32.totalorder %s109, %s112
      %p121 = scmp.eq.s32.totalorder %s20, 1
      %p122 = por %p120, %p121
      %p123 = scmp.ne.s32.totalorder %s112, %s113
      %p124 = scmp.eq.s32.totalorder %s20, 0
      %p125 = por %p123, %p124
      %p126 = scmp.ne.s32.totalorder %s112, %s113
      %p127 = scmp.eq.s32.totalorder %s21, 1
      %p128 = por %p126, %p127
      %p130 = scmp.ne.s32.totalorder %s113, %s129
      %p131 = scmp.eq.s32.totalorder %s21, 0
      %p132 = por %p130, %p131
      %p133 = scmp.le.s32.totalorder 1, %s15
      %p134 = scmp.lt.s32.totalorder %s15, 3
      %p135 = pnand %p133, %p134
      %p136 = pneg %p135
      // Predicated region
      $region9: #{tpu_custom_call.1} parent=5 // pred_check
        _
      $region10: #{tpu_custom_call.1} parent=5 // pred_check_branch
        %138 = sbr.rel (%p135) target = $region12
      $region11: #{tpu_custom_call.1} parent=5 // pred_region
        %s139 = ssub.s32 %s15, 1
        // Predicated region
        $region13: #{tpu_custom_call.1} parent=11 // pred_check
          %p140 = pneg %p76
        $region14: #{tpu_custom_call.1} parent=11 // pred_check_branch
          %142 = sbr.rel (%p140) target = $region16
        $region15: #{tpu_custom_call.1} parent=11 // pred_region
          _
        $region16: #{tpu_custom_call.1} parent=11 // pred_fallthru
          _
        // Predicated region
        $region17: #{tpu_custom_call.1} parent=11 // pred_check
          %p143 = pneg %p97
        $region18: #{tpu_custom_call.1} parent=11 // pred_check_branch
          %145 = sbr.rel (%p143) target = $region20
        $region19: #{tpu_custom_call.1} parent=11 // pred_region
          _
        $region20: #{tpu_custom_call.1} parent=11 // pred_fallthru
          _
      $region12: #{tpu_custom_call.1} parent=5 // pred_fallthru
        _
      %p146 = scmp.lt.s32.totalorder %s15, 2
      // Predicated region
      $region21: #{tpu_custom_call.1} parent=5 // pred_check
        %p147 = pneg %p146
      $region22: #{tpu_custom_call.1} parent=5 // pred_check_branch
        %149 = sbr.rel (%p147) target = $region24
      $region23: #{tpu_custom_call.1} parent=5 // pred_region
        // Predicated region
        $region25: #{tpu_custom_call.1} parent=23 // pred_check
          %p150 = pneg %p49
        $region26: #{tpu_custom_call.1} parent=23 // pred_check_branch
          %152 = sbr.rel (%p150) target = $region28
        $region27: #{tpu_custom_call.1} parent=23 // pred_region
          %s153 = sand.u32 %s39, 1
          %s154 = scalar_lea.sflag [#allocation3], %s153
          %s155 = sand.u32 %s39, 1
          %s156 = smul.addr %s155, 8
          %s157 = scalar_lea.vmem [#allocation2], %s156
          %s158 = smul.u32 2, %s23
          %s160 = ssub.s32 128, 128
          %161 = vsyncadd %s154, %s160
          %s162 = smul.addr %s22, 2
          %s163 = sadd.s32 %s158, %s162
          %s164 = smul.addr %s163, 64
          %s165 = scalar_lea.hbm %s0, %s164
          %s167 = sshll.u32 %s157, 4
          %s168 = int_to_ptr.vmem [resolvable:$true] %s167
          %170 = dma.hbm_to_vmem [thread:$0]  %s165, 128, %s168, %s154
        $region28: #{tpu_custom_call.1} parent=23 // pred_fallthru
          _
      $region24: #{tpu_custom_call.1} parent=5 // pred_fallthru
        _
      %p171 = scmp.le.s32.totalorder 1, %s15
      %p172 = scmp.lt.s32.totalorder %s15, 3
      %p173 = pnand %p171, %p172
      %p174 = pneg %p173
      // Predicated region
      $region29: #{tpu_custom_call.1} parent=5 // pred_check
        _
      $region30: #{tpu_custom_call.1} parent=5 // pred_check_branch
        %176 = sbr.rel (%p173) target = $region32
      $region31: #{tpu_custom_call.1} parent=5 // pred_region
        %s177 = ssub.s32 %s15, 1
        %s178 = sand.u32 %s42, 1
        %s179 = scalar_lea.sflag [#allocation3], %s178
        %s180 = sand.u32 %s42, 1
        %s181 = smul.addr %s180, 8
        %s182 = scalar_lea.vmem [#allocation2], %s181
        // Predicated region
        $region33: #{tpu_custom_call.1} parent=31 // pred_check
          %p183 = pneg %p55
        $region34: #{tpu_custom_call.1} parent=31 // pred_check_branch
          %185 = sbr.rel (%p183) target = $region36
        $region35: #{tpu_custom_call.1} parent=31 // pred_region
          %186 = dma.done %s179, 128
        $region36: #{tpu_custom_call.1} parent=31 // pred_fallthru
          _
        %s187 = sand.u32 %s42, 1
        %s188 = scalar_lea.sflag [#allocation3], %s187
        %s189 = sand.u32 %s42, 1
        %s190 = smul.addr %s189, 8
        %s191 = scalar_lea.vmem [#allocation2], %s190
        %p192 = pneg %p55
        %p193 = pneg %p52
        %p194 = pneg %p76
        %p195 = pneg %p73
        %p196 = pneg %p97
        %p197 = pneg %p94
        %p198 = pneg %p125
        %p199 = pneg %p122
        %s200 = sand.u32 %s112, 1
        %s201 = scalar_lea.sflag [#allocation4], %s200
        %s202 = sand.u32 %s112, 1
        %s203 = smul.addr %s202, 16
        %s204 = scalar_lea.vmem [#allocation5], %s203
        %s205 = smul.u32 2, %s25
        %s206 = smul.u32 2, %s25
        %v208 = vld [vmem:[%s182] sm:$0xff]
        %v210 = vcombine.high %v208, %v208
        %v212 = vpack.c.bf16 %v208, %v208
        %v213 = vpack.c.bf16 %v210, %v210
        %v214 = vld [vmem:[%s1] sm:$0xf]
        %v215 = vld [vmem:[%s2] sm:$0xff]
        %217 = vset.pattern.permute.xlu0 0
        %218 = vperm.xlu0 %217, %v215
        %v219 = vpop.permute.xlu0 %218
        %vm221 = vcmask 31744
        %v223 = vsel %vm221, %v214, 0
        %vm225 = vcmask 1041408
        %v227 = vsel %vm225, %v212, 0
        %v230 = vsel %vm225, %v213, 0
        %232 = vmatprep.subr.bf16.mxu0 0
        %233 = vmatpush1.bf16.msra.mxu0 0
        %234 = vmatprep.subr.bf16.mxu0 0
        %235 = vmatpush1.bf16.msra.mxu0 0
        %236 = vmatprep.subr.bf16.mxu0 0
        %237 = vmatpush1.bf16.msra.mxu0 0
        %238 = vmatprep.subr.bf16.mxu0 0
        %239 = vmatpush1.bf16.msra.mxu0 0
        %240 = vmatprep.subr.bf16.mxu0 0
        %241 = vmatpush1.bf16.msra.mxu0 0
        %242 = vmatprep.subr.bf16.mxu0 0
        %243 = vmatpush1.bf16.msra.mxu0 0
        %244 = vmatprep.subr.bf16.mxu0 0
        %245 = vmatpush1.bf16.msra.mxu0 0
        %246 = vmatprep.subr.bf16.mxu0 %v230
        %247 = vmatpush1.bf16.msra.mxu0 %v227
        %248 = vmatprep.subr.bf16.mxu0 0
        %249 = vmatpush2.bf16.msra.mxu0 0
        %250 = vmatprep.subr.bf16.mxu0 0
        %251 = vmatpush2.bf16.msra.mxu0 0
        %252 = vmatprep.subr.bf16.mxu0 0
        %253 = vmatpush2.bf16.msra.mxu0 0
        %254 = vmatprep.subr.bf16.mxu0 0
        %255 = vmatpush2.bf16.msra.mxu0 0
        %256 = vmatprep.subr.bf16.mxu0 0
        %257 = vmatpush2.bf16.msra.mxu0 0
        %258 = vmatprep.subr.bf16.mxu0 0
        %259 = vmatpush2.bf16.msra.mxu0 0
        %260 = vmatprep.subr.bf16.mxu0 0
        %261 = vmatpush2.bf16.msra.mxu0 0
        %262 = vmatprep.subr.bf16.mxu0 0
        %263 = vmatpush2.bf16.msra.mxu0 0
        %264 = vmatprep.mubr.bf16.mxu0 0
        %265 = vmatmul.mubr.bf16.gmra.mxu0 %v223
        %v266 = vpop.f32.mrf.mxu0
        %v267 = vadd.f32 %v219, %v266
        %v268 = vpop.f32.mrf.mxu0
        %v269 = vadd.f32 %v219, %v268
        %v270 = vpop.f32.mrf.mxu0
        %v271 = vpop.f32.mrf.mxu0
        %272 = vdwg.mxu0
        %273 = vst [vmem:[%s204] sm:$0xff] %v267
        %274 = vst [vmem:[%s204 + $0x8] sm:$0xff] %v269
        %s275 = sand.u32 %s112, 1
        %s276 = scalar_lea.sflag [#allocation4], %s275
        %s277 = sand.u32 %s112, 1
        %s278 = smul.addr %s277, 16
        %s279 = scalar_lea.vmem [#allocation5], %s278
        // Predicated region
        $region37: #{tpu_custom_call.1} parent=31 // pred_check
          %p280 = pneg %p122
        $region38: #{tpu_custom_call.1} parent=31 // pred_check_branch
          %282 = sbr.rel (%p280) target = $region40
        $region39: #{tpu_custom_call.1} parent=31 // pred_region
          %s283 = smul.u32 2, %s25
          %s285 = ssub.s32 256, 256
          %286 = vsyncadd %s276, %s285
          %s287 = smul.addr %s24, 2
          %s288 = sadd.s32 %s283, %s287
          %s289 = smul.addr %s288, 128
          %s290 = scalar_lea.hbm %s3, %s289
          %s292 = sshll.u32 %s279, 4
          %s293 = int_to_ptr.vmem [resolvable:$true] %s292
          %295 = dma.vmem_to_hbm [thread:$0]  %s293, 256, %s290, %s276
        $region40: #{tpu_custom_call.1} parent=31 // pred_fallthru
          _
      $region32: #{tpu_custom_call.1} parent=5 // pred_fallthru
        _
      %p296 = scmp.le.s32.totalorder 2, %s15
      // Predicated region
      $region41: #{tpu_custom_call.1} parent=5 // pred_check
        %p297 = pneg %p296
      $region42: #{tpu_custom_call.1} parent=5 // pred_check_branch
        %299 = sbr.rel (%p297) target = $region44
      $region43: #{tpu_custom_call.1} parent=5 // pred_region
        %s300 = ssub.s32 %s15, 2
        // Predicated region
        $region45: #{tpu_custom_call.1} parent=43 // pred_check
          %p301 = pneg %p128
        $region46: #{tpu_custom_call.1} parent=43 // pred_check_branch
          %303 = sbr.rel (%p301) target = $region48
        $region47: #{tpu_custom_call.1} parent=43 // pred_region
          %s304 = sand.u32 %s113, 1
          %s305 = scalar_lea.sflag [#allocation4], %s304
          %s306 = sand.u32 %s113, 1
          %s307 = smul.addr %s306, 16
          %s308 = scalar_lea.vmem [#allocation5], %s307
          %309 = dma.done %s305, 256
        $region48: #{tpu_custom_call.1} parent=43 // pred_fallthru
          _
      $region44: #{tpu_custom_call.1} parent=5 // pred_fallthru
        _
    $region6: #{tpu_custom_call.1} parent=1 // loop_footer
      %s19 = sadd.s32 1, %s15
    $region7: #{tpu_custom_call.1} parent=1 // loop_footer_branch
      %14 = sbr.rel target = $region3
    $region8: #{tpu_custom_call.1} parent=1 // loop_exit
      _
    %310 = vsyncpa [#allocation3], 1
    %s311 = scalar_lea.sflag [#allocation3], 1
    %312 = vsyncpa %s311, 1
    %313 = vsyncpa [#allocation4], 1
    %s314 = scalar_lea.sflag [#allocation4], 1
    %315 = vsyncpa %s314, 1

</llo_original>
